<compile_context>
chip_gen: v7x
topology: tpu7x:2x2x1
jax: 0.10.0
libtpu: 0.0.40
codegen_flags: <defaults>
</compile_context>

<pallas_src>
import jax
import jax.numpy as jnp
from jax.experimental import pallas as pl
from jax.experimental.pallas import tpu as pltpu


def normalized_model_kernel(x_ref, w1t_ref, b1_ref, w2t_ref, b2_ref, out_ref, acc_ref):
    # x_ref:   (1, C, TM)   one image's tile of flattened spatial positions (HW on lanes)
    # w1t_ref: (C1, C)      folded (normalize + 1x1 conv) weight, transposed (VMEM-resident)
    # b1_ref:  (C1, 1)      folded conv bias (column, broadcasts over lanes)
    # w2t_ref: (K, C1)      head weight, transposed, already scaled by 1/HW
    # b2_ref:  (K, 1)       head bias
    # out_ref: (1, K, 1)    logits for this image (written once, at the last spatial tile)
    # acc_ref: (C1, 1)      running spatial sum of ReLU(conv) for this image (VMEM scratch)
    j = pl.program_id(1)

    @pl.when(j == 0)
    def _init():
        acc_ref[...] = jnp.zeros_like(acc_ref)

    # normalize + 1x1-conv fused into a single MXU matmul (normalization folded into w1t/b1)
    h = jnp.dot(w1t_ref[...], x_ref[0],
                preferred_element_type=jnp.float32)                # (C1, TM), lane-dense
    h = jnp.maximum(h + b1_ref[...], 0.0)                          # bias + ReLU (VPU)
    # global-average-pool contribution of this tile: lane reduction -> running sum (XLU slot)
    acc_ref[...] += jnp.sum(h, axis=1, keepdims=True)              # (C1, 1)

    @pl.when(j == pl.num_programs(1) - 1)
    def _finalize():
        # 1/HW already folded into w2t, so the accumulated *sum* is the mean-pooled feature.
        logits = jnp.dot(w2t_ref[...], acc_ref[...],
                         preferred_element_type=jnp.float32) + b2_ref[...]   # (K, 1)
        out_ref[0] = logits.astype(out_ref.dtype)


def normalized_model_forward(x_nchw, mean, std, w1, b1, w2, b2, *, tm=None):
    """x_nchw: (N, C, H, W) float32. Returns logits (N, K)."""
    n, c, h, w = x_nchw.shape
    hw = h * w
    c1 = w1.shape[1]
    k = w2.shape[1]

    # ---- Fold normalization into the 1x1-conv parameters (wrapper-side, tiny, one-shot) ----
    inv_std = (1.0 / std).astype(jnp.float32)                       # (C,)
    w1_fold = (w1 * inv_std[:, None]).astype(jnp.float32)           # (C, C1)
    b1_fold = (b1 - (mean * inv_std) @ w1).astype(jnp.float32)      # (C1,)
    # Fold the 1/HW of the global average pool into the head weight.
    w2_fold = (w2 / hw).astype(jnp.float32)                         # (C1, K)

    # Transposed, lane-dense layout: channels on sublanes, spatial (HW) on lanes.
    w1t = jnp.transpose(w1_fold)                                    # (C1, C)
    w2t = jnp.transpose(w2_fold)                                    # (K, C1)
    b1c = b1_fold.reshape(c1, 1)
    b2c = b2.reshape(k, 1).astype(jnp.float32)

    # NCHW -> (N, C, HW): a pure reshape, no transpose, no padding.
    x = x_nchw.reshape(n, c, hw).astype(jnp.float32)

    # Spatial tile on the lane axis: biggest power-of-two divisor of HW (<= 8192) so each
    # step moves a large, aligned slab; falls back to the full extent (always a legal block).
    if tm is None:
        tm = hw
        for cand in (8192, 4096, 2048, 1024, 512, 256, 128):
            if hw % cand == 0:
                tm = cand
                break
    assert hw % tm == 0, "spatial tile must divide H*W"

    grid = (n, hw // tm)

    flops = 2 * n * hw * c * c1 + 2 * n * c1 * k
    bytes_accessed = (x.size + w1t.size + b1c.size + w2t.size + b2c.size + n * k) * 4

    out = pl.pallas_call(
        normalized_model_kernel,
        out_shape=jax.ShapeDtypeStruct((n, k, 1), jnp.float32),
        grid_spec=pltpu.PrefetchScalarGridSpec(
            num_scalar_prefetch=0,
            grid=grid,
            in_specs=[
                pl.BlockSpec((1, c, tm), lambda i, j: (i, 0, j)),   # x tile (one image)
                pl.BlockSpec((c1, c), lambda i, j: (0, 0)),         # w1t (resident)
                pl.BlockSpec((c1, 1), lambda i, j: (0, 0)),         # b1
                pl.BlockSpec((k, c1), lambda i, j: (0, 0)),         # w2t
                pl.BlockSpec((k, 1), lambda i, j: (0, 0)),          # b2
            ],
            out_specs=pl.BlockSpec((1, k, 1), lambda i, j: (i, 0, 0)),
            scratch_shapes=[pltpu.VMEM((c1, 1), jnp.float32)],      # pooled-sum accumulator
        ),
        compiler_params=pltpu.CompilerParams(
            dimension_semantics=("parallel", "arbitrary"),          # batch parallel, pool axis reduces
        ),
        cost_estimate=pl.CostEstimate(
            flops=flops, transcendentals=0, bytes_accessed=bytes_accessed),
    )(x, w1t, b1c, w2t, b2c)

    return out.reshape(n, k)


if __name__ == "__main__":
    # Small shapes consistent with the module: NCHW image input.
    N, C, H, W = 2, 4, 16, 16
    C1, K = 16, 8

    key = jax.random.PRNGKey(0)
    kx, kw1, kb1, kw2, kb2 = jax.random.split(key, 5)

    x = jax.random.normal(kx, (N, C, H, W), dtype=jnp.float32)

    # Deterministic per-channel normalization constants.
    mean = jnp.array([0.485, 0.456, 0.406, 0.5], dtype=jnp.float32)
    std = jnp.array([0.229, 0.224, 0.225, 0.25], dtype=jnp.float32)

    # Deterministic inner-model parameters.
    w1 = 0.1 * jax.random.normal(kw1, (C, C1), dtype=jnp.float32)
    b1 = 0.1 * jax.random.normal(kb1, (C1,), dtype=jnp.float32)
    w2 = 0.1 * jax.random.normal(kw2, (C1, K), dtype=jnp.float32)
    b2 = 0.1 * jax.random.normal(kb2, (K,), dtype=jnp.float32)

    out = normalized_model_forward(x, mean, std, w1, b1, w2, b2)
    out = jax.block_until_ready(out)

    # Pure-JAX reference (normalize -> 1x1 conv -> ReLU -> GAP -> linear).
    xn_ref = (x - mean[None, :, None, None]) / std[None, :, None, None]
    xcl = jnp.transpose(xn_ref, (0, 2, 3, 1)).reshape(N * H * W, C)
    h_ref = jnp.maximum(xcl @ w1 + b1, 0.0).reshape(N, H * W, C1).mean(axis=1)
    ref = h_ref @ w2 + b2

    assert out.shape == (N, K)
    assert jnp.allclose(out, ref, atol=1e-4, rtol=1e-4)

    print("KERNEL_OK")
</pallas_src>

<mosaic_0001>
module attributes {stable_mosaic.version = 11 : i64} {
  func.func @normalized_model_kernel(%arg0: i32, %arg1: i32, %arg2: memref<1x4x256xf32, #tpu.memory_space<vmem>>, %arg3: memref<16x4xf32, #tpu.memory_space<vmem>>, %arg4: memref<16x1xf32, #tpu.memory_space<vmem>>, %arg5: memref<8x16xf32, #tpu.memory_space<vmem>>, %arg6: memref<8x1xf32, #tpu.memory_space<vmem>>, %arg7: memref<1x8x1xf32, #tpu.memory_space<vmem>>, %arg8: memref<16x1xf32, #tpu.memory_space<vmem>>) attributes {dimension_semantics = [#tpu.dimension_semantics<parallel>, #tpu.dimension_semantics<arbitrary>], iteration_bounds = array<i64: 2, 1>, scalar_prefetch = 0 : i64, scratch_operands = 1 : i64, tpu.core_type = #tpu.core_type<tc>, window_params = [{transform_indices = @transform_0, window_bounds = array<i64: 1, 4, 256>}, {pipeline_mode = #tpu.pipeline_mode<synchronous>, transform_indices = @transform_1, window_bounds = array<i64: 16, 4>}, {pipeline_mode = #tpu.pipeline_mode<synchronous>, transform_indices = @transform_2, window_bounds = array<i64: 16, 1>}, {pipeline_mode = #tpu.pipeline_mode<synchronous>, transform_indices = @transform_3, window_bounds = array<i64: 8, 16>}, {pipeline_mode = #tpu.pipeline_mode<synchronous>, transform_indices = @transform_4, window_bounds = array<i64: 8, 1>}, {transform_indices = @transform_5, window_bounds = array<i64: 1, 8, 1>}]} {
    %c0_i32 = arith.constant 0 : i32
    %0 = arith.cmpi eq, %arg1, %c0_i32 : i32
    %1 = arith.extui %0 : i1 to i32
    %c0_i32_0 = arith.constant 0 : i32
    %2 = arith.cmpi ne, %1, %c0_i32_0 : i32
    scf.if %2 {
      %cst_15 = arith.constant 0.000000e+00 : f32
      %20 = vector.broadcast %cst_15 : f32 to vector<16x1xf32>
      %c0_16 = arith.constant 0 : index
      %c0_17 = arith.constant 0 : index
      %21 = vector.load %arg8[%c0_16, %c0_17] : memref<16x1xf32, #tpu.memory_space<vmem>>, vector<16x1xf32>
      tpu.vector_store %arg8[%c0_16, %c0_17], %20 {strides = array<i32>} : memref<16x1xf32, #tpu.memory_space<vmem>>, vector<16x1xf32>,
    } else {
    }
    %c0 = arith.constant 0 : index
    %c0_1 = arith.constant 0 : index
    %3 = vector.load %arg3[%c0, %c0_1] : memref<16x4xf32, #tpu.memory_space<vmem>>, vector<16x4xf32>
    %c0_2 = arith.constant 0 : index
    %c0_3 = arith.constant 0 : index
    %c0_4 = arith.constant 0 : index
    %4 = vector.load %arg2[%c0_2, %c0_3, %c0_4] : memref<1x4x256xf32, #tpu.memory_space<vmem>>, vector<1x4x256xf32>
    %5 = vector.shape_cast %4 : vector<1x4x256xf32> to vector<4x256xf32>
    %cst = arith.constant dense<0.000000e+00> : vector<16x256xf32>
    %6 = tpu.matmul %3, %5, %cst {dimension_numbers = #tpu.dot_dimension_numbers<[1], [0], [0], [1], [0, 0, 1, 1], [], []>} : vector<16x4xf32>, vector<4x256xf32>, vector<16x256xf32> -> vector<16x256xf32>
    %c0_5 = arith.constant 0 : index
    %c0_6 = arith.constant 0 : index
    %7 = vector.load %arg4[%c0_5, %c0_6] : memref<16x1xf32, #tpu.memory_space<vmem>>, vector<16x1xf32>
    %8 = vector.broadcast %7 : vector<16x1xf32> to vector<16x256xf32>
    %9 = arith.addf %6, %8 : vector<16x256xf32>
    %cst_7 = arith.constant 0.000000e+00 : f32
    %10 = vector.broadcast %cst_7 : f32 to vector<16x256xf32>
    %11 = arith.maximumf %9, %10 : vector<16x256xf32>
    %c0_8 = arith.constant 0 : index
    %c0_9 = arith.constant 0 : index
    %12 = vector.load %arg8[%c0_8, %c0_9] : memref<16x1xf32, #tpu.memory_space<vmem>>, vector<16x1xf32>
    %cst_10 = arith.constant dense<0.000000e+00> : vector<16xf32>
    %13 = vector.multi_reduction <add>, %11, %cst_10 [1] : vector<16x256xf32> to vector<16xf32>
    %14 = vector.shape_cast %13 : vector<16xf32> to vector<16x1xf32>
    %15 = arith.addf %12, %14 : vector<16x1xf32>
    %c0_11 = arith.constant 0 : index
    %c0_12 = arith.constant 0 : index
    %16 = vector.load %arg8[%c0_11, %c0_12] : memref<16x1xf32, #tpu.memory_space<vmem>>, vector<16x1xf32>
    tpu.vector_store %arg8[%c0_11, %c0_12], %15 {strides = array<i32>} : memref<16x1xf32, #tpu.memory_space<vmem>>, vector<16x1xf32>,
    %c0_i32_13 = arith.constant 0 : i32
    %17 = arith.cmpi eq, %arg1, %c0_i32_13 : i32
    %18 = arith.extui %17 : i1 to i32
    %c0_i32_14 = arith.constant 0 : i32
    %19 = arith.cmpi ne, %18, %c0_i32_14 : i32
    scf.if %19 {
      %c0_15 = arith.constant 0 : index
      %c0_16 = arith.constant 0 : index
      %20 = vector.load %arg5[%c0_15, %c0_16] : memref<8x16xf32, #tpu.memory_space<vmem>>, vector<8x16xf32>
      %c0_17 = arith.constant 0 : index
      %c0_18 = arith.constant 0 : index
      %21 = vector.load %arg8[%c0_17, %c0_18] : memref<16x1xf32, #tpu.memory_space<vmem>>, vector<16x1xf32>
      %cst_19 = arith.constant dense<0.000000e+00> : vector<8x1xf32>
      %22 = tpu.matmul %20, %21, %cst_19 {dimension_numbers = #tpu.dot_dimension_numbers<[1], [0], [0], [1], [0, 0, 1, 1], [], []>} : vector<8x16xf32>, vector<16x1xf32>, vector<8x1xf32> -> vector<8x1xf32>
      %c0_20 = arith.constant 0 : index
      %c0_21 = arith.constant 0 : index
      %23 = vector.load %arg6[%c0_20, %c0_21] : memref<8x1xf32, #tpu.memory_space<vmem>>, vector<8x1xf32>
      %24 = arith.addf %22, %23 : vector<8x1xf32>
      %c0_22 = arith.constant 0 : index
      %c0_23 = arith.constant 0 : index
      %c0_24 = arith.constant 0 : index
      %25 = vector.load %arg7[%c0_22, %c0_23, %c0_24] : memref<1x8x1xf32, #tpu.memory_space<vmem>>, vector<1x8x1xf32>
      %26 = vector.shape_cast %25 : vector<1x8x1xf32> to vector<8x1xf32>
      %27 = vector.shape_cast %24 : vector<8x1xf32> to vector<1x8x1xf32>
      tpu.vector_store %arg7[%c0_22, %c0_23, %c0_24], %27 {strides = array<i32>} : memref<1x8x1xf32, #tpu.memory_space<vmem>>, vector<1x8x1xf32>,
    } else {
    }
    return
  }
  func.func @transform_0(%arg0: i32, %arg1: i32) -> (i32, i32, i32) {
    %c0_i32 = arith.constant 0 : i32
    %c0_i32_0 = arith.constant 0 : i32
    return %arg0, %c0_i32, %arg1 : i32, i32, i32
  }
  func.func @transform_1(%arg0: i32, %arg1: i32) -> (i32, i32) {
    %c0_i32 = arith.constant 0 : i32
    %c0_i32_0 = arith.constant 0 : i32
    %c0_i32_1 = arith.constant 0 : i32
    return %c0_i32, %c0_i32_0 : i32, i32
  }
  func.func @transform_2(%arg0: i32, %arg1: i32) -> (i32, i32) {
    %c0_i32 = arith.constant 0 : i32
    %c0_i32_0 = arith.constant 0 : i32
    %c0_i32_1 = arith.constant 0 : i32
    return %c0_i32, %c0_i32_0 : i32, i32
  }
  func.func @transform_3(%arg0: i32, %arg1: i32) -> (i32, i32) {
    %c0_i32 = arith.constant 0 : i32
    %c0_i32_0 = arith.constant 0 : i32
    %c0_i32_1 = arith.constant 0 : i32
    return %c0_i32, %c0_i32_0 : i32, i32
  }
  func.func @transform_4(%arg0: i32, %arg1: i32) -> (i32, i32) {
    %c0_i32 = arith.constant 0 : i32
    %c0_i32_0 = arith.constant 0 : i32
    %c0_i32_1 = arith.constant 0 : i32
    return %c0_i32, %c0_i32_0 : i32, i32
  }
  func.func @transform_5(%arg0: i32, %arg1: i32) -> (i32, i32, i32) {
    %c0_i32 = arith.constant 0 : i32
    %c0_i32_0 = arith.constant 0 : i32
    %c0_i32_1 = arith.constant 0 : i32
    return %arg0, %c0_i32, %c0_i32_0 : i32, i32, i32
  }
}

</mosaic_0001>

<llo_original>
// kernel: tpu_custom_call.1
$region0: #{tpu_custom_call.1}
  #allocation0 [shape = 'u32[]', space=smem, size = 0x4, offset = 0x4, fixed_abs, tag = 'smem constant byte address 0x4 - core index']
  #allocation1 [shape = 'u32[144,128]{1,0:T(1,128)}', space=vmem, size = 0x12000, scoped, tag = 'internal scratch']
  #allocation2 [shape = 'f32[16,1]{1,0:T(8,128)}', space=vmem, size = 0x2000, scoped, tag = 'scratch operand']
  %s0 = inlined_call_operand.vmem [shape: f32[2,4,256], index: 0, kind: input, shape index: {}]
  %s1 = inlined_call_operand.vmem [shape: f32[16,4], index: 1, kind: input, shape index: {}]
  %s2 = inlined_call_operand.vmem [shape: f32[16,1], index: 2, kind: input, shape index: {}]
  %s3 = inlined_call_operand.vmem [shape: f32[8,16], index: 3, kind: input, shape index: {}]
  %s4 = inlined_call_operand.vmem [shape: f32[8,1], index: 4, kind: input, shape index: {}]
  %s5 = inlined_call_operand.vmem [shape: f32[2,8,1], index: 5, kind: output, shape index: {}]
  %s6 = sld [smem:[#allocation0]]
  $region61: #{tpu_custom_call.1} parent=0
    _
  %s8 = ssub.s32 1, %s6
  %s9 = scalar_select 0, %s8, %s6
  loop: start=0, step=1, limit=4
  $region2: #{tpu_custom_call.1} parent=0 // loop_pre_header
    _
  $region3: #{tpu_custom_call.1} parent=0 // loop_header
    %s11 = sphi 0, %s15
    %p12 = scmp.ge.s32.totalorder %s11, 4
    %s18 = sphi 0, %s30
    %s19 = sphi 0, %s26
    %s20 = sphi 0, %s18
    %s21 = sphi 0, %s19
    %s22 = sphi 0, %s20
    %s23 = sphi 0, %s21
    %s35 = sphi 0, %s37
    %s38 = sphi 0, %s35
    %s39 = sphi 0, %s38
    %s55 = sphi 0, %s39
    %s59 = sphi 0, %s59
    %s61 = sphi 0, %s59
    %s62 = sphi 0, %s61
    %s76 = sphi 0, %s62
    %s80 = sphi 0, %s80
    %s82 = sphi 0, %s80
    %s83 = sphi 0, %s82
    %s97 = sphi 0, %s83
    %s101 = sphi 0, %s101
    %s103 = sphi 0, %s101
    %s104 = sphi 0, %s103
    %s118 = sphi 0, %s104
    %s122 = sphi 0, %s122
    %s124 = sphi 0, %s122
    %s125 = sphi 0, %s124
    %s139 = sphi 0, %s125
    %s145 = sphi 0, %s147
    %s148 = sphi 0, %s145
    %s149 = sphi 0, %s148
    %s165 = sphi 0, %s149
  $region4: #{tpu_custom_call.1} parent=0 // loop_header_branch
    %14 = sbr.rel (%p12) target = $region8
  $region5: #{tpu_custom_call.1} parent=0 // loop_body
    %s16 = ssub.s32 %s11, 1
    %s17 = ssub.s32 %s11, 2
    %s24 = sadd.s32 1, %s19
    %p25 = scmp.ge.s32.totalorder %s24, 1
    %s26 = scalar_select %p25, 0, %s24
    %s27 = sadd.s32 1, %s18
    %s28 = scalar_select %p25, %s27, %s18
    %p29 = scmp.ge.s32.totalorder %s28, 2
    %s30 = scalar_select %p29, 0, %s28
    %s31 = ssub.s32 %s18, %s30
    %s32 = ssub.s32 %s19, %s26
    %s33 = sor.u32 %s31, %s32
    %p34 = scmp.eq.s32.totalorder %s33, 0
    %s36 = sadd.s32 %s35, 1
    %s37 = scalar_select %p34, %s35, %s36
    %p40 = pneg %p34
    %p41 = scmp.eq.s32.totalorder %s11, 1
    %p42 = por %p40, %p41
    %p43 = scmp.ne.s32.totalorder %s35, %s38
    %p44 = scmp.eq.s32.totalorder %s11, 0
    %p45 = por %p43, %p44
    %p46 = scmp.ne.s32.totalorder %s35, %s38
    %p47 = scmp.eq.s32.totalorder %s16, 1
    %p48 = por %p46, %p47
    %p49 = scmp.ne.s32.totalorder %s38, %s39
    %p50 = scmp.eq.s32.totalorder %s16, 0
    %p51 = por %p49, %p50
    %p52 = scmp.ne.s32.totalorder %s38, %s39
    %p53 = scmp.eq.s32.totalorder %s17, 1
    %p54 = por %p52, %p53
    %p56 = scmp.ne.s32.totalorder %s39, %s55
    %p57 = scmp.eq.s32.totalorder %s17, 0
    %p58 = por %p56, %p57
    %s60 = sadd.s32 %s59, 1
    %p63 = scmp.eq.s32.totalorder %s11, 1
    %p64 = scmp.ne.s32.totalorder %s59, %s61
    %p65 = scmp.eq.s32.totalorder %s11, 0
    %p66 = por %p64, %p65
    %p67 = scmp.ne.s32.totalorder %s59, %s61
    %p68 = scmp.eq.s32.totalorder %s16, 1
    %p69 = por %p67, %p68
    %p70 = scmp.ne.s32.totalorder %s61, %s62
    %p71 = scmp.eq.s32.totalorder %s16, 0
    %p72 = por %p70, %p71
    %p73 = scmp.ne.s32.totalorder %s61, %s62
    %p74 = scmp.eq.s32.totalorder %s17, 1
    %p75 = por %p73, %p74
    %p77 = scmp.ne.s32.totalorder %s62, %s76
    %p78 = scmp.eq.s32.totalorder %s17, 0
    %p79 = por %p77, %p78
    %s81 = sadd.s32 %s80, 1
    %p84 = scmp.eq.s32.totalorder %s11, 1
    %p85 = scmp.ne.s32.totalorder %s80, %s82
    %p86 = scmp.eq.s32.totalorder %s11, 0
    %p87 = por %p85, %p86
    %p88 = scmp.ne.s32.totalorder %s80, %s82
    %p89 = scmp.eq.s32.totalorder %s16, 1
    %p90 = por %p88, %p89
    %p91 = scmp.ne.s32.totalorder %s82, %s83
    %p92 = scmp.eq.s32.totalorder %s16, 0
    %p93 = por %p91, %p92
    %p94 = scmp.ne.s32.totalorder %s82, %s83
    %p95 = scmp.eq.s32.totalorder %s17, 1
    %p96 = por %p94, %p95
    %p98 = scmp.ne.s32.totalorder %s83, %s97
    %p99 = scmp.eq.s32.totalorder %s17, 0
    %p100 = por %p98, %p99
    %s102 = sadd.s32 %s101, 1
    %p105 = scmp.eq.s32.totalorder %s11, 1
    %p106 = scmp.ne.s32.totalorder %s101, %s103
    %p107 = scmp.eq.s32.totalorder %s11, 0
    %p108 = por %p106, %p107
    %p109 = scmp.ne.s32.totalorder %s101, %s103
    %p110 = scmp.eq.s32.totalorder %s16, 1
    %p111 = por %p109, %p110
    %p112 = scmp.ne.s32.totalorder %s103, %s104
    %p113 = scmp.eq.s32.totalorder %s16, 0
    %p114 = por %p112, %p113
    %p115 = scmp.ne.s32.totalorder %s103, %s104
    %p116 = scmp.eq.s32.totalorder %s17, 1
    %p117 = por %p115, %p116
    %p119 = scmp.ne.s32.totalorder %s104, %s118
    %p120 = scmp.eq.s32.totalorder %s17, 0
    %p121 = por %p119, %p120
    %s123 = sadd.s32 %s122, 1
    %p126 = scmp.eq.s32.totalorder %s11, 1
    %p127 = scmp.ne.s32.totalorder %s122, %s124
    %p128 = scmp.eq.s32.totalorder %s11, 0
    %p129 = por %p127, %p128
    %p130 = scmp.ne.s32.totalorder %s122, %s124
    %p131 = scmp.eq.s32.totalorder %s16, 1
    %p132 = por %p130, %p131
    %p133 = scmp.ne.s32.totalorder %s124, %s125
    %p134 = scmp.eq.s32.totalorder %s16, 0
    %p135 = por %p133, %p134
    %p136 = scmp.ne.s32.totalorder %s124, %s125
    %p137 = scmp.eq.s32.totalorder %s17, 1
    %p138 = por %p136, %p137
    %p140 = scmp.ne.s32.totalorder %s125, %s139
    %p141 = scmp.eq.s32.totalorder %s17, 0
    %p142 = por %p140, %p141
    %s143 = ssub.s32 %s18, %s30
    %p144 = scmp.eq.s32.totalorder %s143, 0
    %s146 = sadd.s32 %s145, 1
    %s147 = scalar_select %p144, %s145, %s146
    %p150 = pneg %p144
    %p151 = scmp.eq.s32.totalorder %s11, 1
    %p152 = por %p150, %p151
    %p153 = scmp.ne.s32.totalorder %s145, %s148
    %p154 = scmp.eq.s32.totalorder %s11, 0
    %p155 = por %p153, %p154
    %p156 = scmp.ne.s32.totalorder %s145, %s148
    %p157 = scmp.eq.s32.totalorder %s16, 1
    %p158 = por %p156, %p157
    %p159 = scmp.ne.s32.totalorder %s148, %s149
    %p160 = scmp.eq.s32.totalorder %s16, 0
    %p161 = por %p159, %p160
    %p162 = scmp.ne.s32.totalorder %s148, %s149
    %p163 = scmp.eq.s32.totalorder %s17, 1
    %p164 = por %p162, %p163
    %p166 = scmp.ne.s32.totalorder %s149, %s165
    %p167 = scmp.eq.s32.totalorder %s17, 0
    %p168 = por %p166, %p167
    %p169 = scmp.le.s32.totalorder 1, %s11
    %p170 = scmp.lt.s32.totalorder %s11, 3
    %p171 = pnand %p169, %p170
    %p172 = pneg %p171
    // Predicated region
    $region9: #{tpu_custom_call.1} parent=5 // pred_check
      _
    $region10: #{tpu_custom_call.1} parent=5 // pred_check_branch
      %174 = sbr.rel (%p171) target = $region12
    $region11: #{tpu_custom_call.1} parent=5 // pred_region
      %s175 = ssub.s32 %s11, 1
      // Predicated region
      $region13: #{tpu_custom_call.1} parent=11 // pred_check
        %p176 = pneg %p72
      $region14: #{tpu_custom_call.1} parent=11 // pred_check_branch
        %178 = sbr.rel (%p176) target = $region16
      $region15: #{tpu_custom_call.1} parent=11 // pred_region
        _
      $region16: #{tpu_custom_call.1} parent=11 // pred_fallthru
        _
      // Predicated region
      $region17: #{tpu_custom_call.1} parent=11 // pred_check
        %p179 = pneg %p93
      $region18: #{tpu_custom_call.1} parent=11 // pred_check_branch
        %181 = sbr.rel (%p179) target = $region20
      $region19: #{tpu_custom_call.1} parent=11 // pred_region
        _
      $region20: #{tpu_custom_call.1} parent=11 // pred_fallthru
        _
      // Predicated region
      $region21: #{tpu_custom_call.1} parent=11 // pred_check
        %p182 = pneg %p114
      $region22: #{tpu_custom_call.1} parent=11 // pred_check_branch
        %184 = sbr.rel (%p182) target = $region24
      $region23: #{tpu_custom_call.1} parent=11 // pred_region
        _
      $region24: #{tpu_custom_call.1} parent=11 // pred_fallthru
        _
      // Predicated region
      $region25: #{tpu_custom_call.1} parent=11 // pred_check
        %p185 = pneg %p135
      $region26: #{tpu_custom_call.1} parent=11 // pred_check_branch
        %187 = sbr.rel (%p185) target = $region28
      $region27: #{tpu_custom_call.1} parent=11 // pred_region
        _
      $region28: #{tpu_custom_call.1} parent=11 // pred_fallthru
        _
    $region12: #{tpu_custom_call.1} parent=5 // pred_fallthru
      _
    %p188 = scmp.lt.s32.totalorder %s11, 2
    // Predicated region
    $region29: #{tpu_custom_call.1} parent=5 // pred_check
      %p189 = pneg %p188
    $region30: #{tpu_custom_call.1} parent=5 // pred_check_branch
      %191 = sbr.rel (%p189) target = $region32
    $region31: #{tpu_custom_call.1} parent=5 // pred_region
      // Predicated region
      $region33: #{tpu_custom_call.1} parent=31 // pred_check
        %p192 = pneg %p45
      $region34: #{tpu_custom_call.1} parent=31 // pred_check_branch
        %194 = sbr.rel (%p192) target = $region36
      $region35: #{tpu_custom_call.1} parent=31 // pred_region
        %s195 = smul.u32 2, %s19
        %p196 = scmp.lt.s32.totalorder %s18, 1
        %s197 = scalar_select %p196, %s18, 1
        %p198 = scmp.lt.s32.totalorder %s195, 1
        %s199 = scalar_select %p198, %s195, 1
        %s200 = smul.addr %s197, 2
        %s201 = sadd.s32 %s199, %s200
        %s202 = smul.addr %s201, 4
        %s203 = scalar_lea.vmem %s0, %s202
        %s204 = smul.u32 2, %s19
      $region36: #{tpu_custom_call.1} parent=31 // pred_fallthru
        _
    $region32: #{tpu_custom_call.1} parent=5 // pred_fallthru
      _
    %p205 = scmp.le.s32.totalorder 1, %s11
    %p206 = scmp.lt.s32.totalorder %s11, 3
    %p207 = pnand %p205, %p206
    %p208 = pneg %p207
    // Predicated region
    $region37: #{tpu_custom_call.1} parent=5 // pred_check
      _
    $region38: #{tpu_custom_call.1} parent=5 // pred_check_branch
      %210 = sbr.rel (%p207) target = $region40
    $region39: #{tpu_custom_call.1} parent=5 // pred_region
      %s211 = ssub.s32 %s11, 1
      %s212 = smul.u32 2, %s21
      %p213 = scmp.lt.s32.totalorder %s20, 1
      %s214 = scalar_select %p213, %s20, 1
      %p215 = scmp.lt.s32.totalorder %s212, 1
      %s216 = scalar_select %p215, %s212, 1
      %s217 = smul.addr %s214, 2
      %s218 = sadd.s32 %s216, %s217
      %s219 = smul.addr %s218, 4
      %s220 = scalar_lea.vmem %s0, %s219
      %p221 = pneg %p51
      %p222 = pneg %p48
      %p223 = pneg %p72
      %p224 = pneg %p69
      %p225 = pneg %p93
      %p226 = pneg %p90
      %p227 = pneg %p114
      %p228 = pneg %p111
      %p229 = pneg %p135
      %p230 = pneg %p132
      %p231 = pneg %p161
      %p232 = pneg %p158
      %p233 = scmp.lt.s32.totalorder %s20, 1
      %s234 = scalar_select %p233, %s20, 1
      %s235 = smul.addr %s234, 8
      %s236 = scalar_lea.vmem %s5, %s235
      %s237 = smul.u32 2, %s21
      %p238 = scmp.lt.s32.totalorder %s20, 1
      %s239 = scalar_select %p238, %s20, 1
      %p240 = scmp.lt.s32.totalorder %s237, 1
      %s241 = scalar_select %p240, %s237, 1
      %s242 = smul.addr %s239, 2
      %s243 = sadd.s32 %s241, %s242
      %s244 = smul.addr %s243, 4
      %s245 = scalar_lea.vmem %s0, %s244
      %s246 = smul.u32 2, %s21
      %p247 = scmp.lt.s32.totalorder %s20, 1
      %s248 = scalar_select %p247, %s20, 1
      %s249 = smul.addr %s248, 8
      %s250 = scalar_lea.vmem %s5, %s249
      %p251 = scmp.eq.s32.totalorder %s21, 0
      // Predicated region
      $region41: #{tpu_custom_call.1} parent=39 // pred_check
        %p252 = pneg %p251
      $region42: #{tpu_custom_call.1} parent=39 // pred_check_branch
        %254 = sbr.rel (%p252) target = $region44
      $region43: #{tpu_custom_call.1} parent=39 // pred_region
        %vm255 = vcmask 7168
        %256 = vst.msk [vmem:[#allocation2] sm:$0xff] %vm255, 0.0
        %257 = vst.msk [vmem:[#allocation2 + $0x8] sm:$0xff] %vm255, 0.0
      $region44: #{tpu_custom_call.1} parent=39 // pred_fallthru
        _
      %v258 = vld [vmem:[%s1] sm:$0xff]
      %v259 = vld [vmem:[%s1 + $0x8] sm:$0xff]
      %v260 = vld [vmem:[%s245] sm:$0xff]
      %v261 = vld [vmem:[%s2] sm:$0xff]
      %v262 = vld [vmem:[%s2 + $0x8] sm:$0xff]
      %264 = vset.pattern.permute.xlu0 0
      %265 = vperm.xlu0 %264, %v261
      %v266 = vpop.permute.xlu0 %265
      %269 = vset.pattern.permute.xlu0 0
      %270 = vperm.xlu0 %269, %v262
      %v271 = vpop.permute.xlu0 %270
      %v274 = vcombine.high %v260, %v260
      %vm275 = vcmask 31744
      %v277 = vsel %vm275, %v258, 0
      %v280 = vsel %vm275, %v259, 0
      %vm282 = vcmask 1043456
      %v283 = vsel %vm282, %v260, 0
      %v285 = vsel %vm282, %v274, 0
      %287 = vmatprep.subr.mxu0 %v285
      %288 = vmatpush1.msra.mxu0 %v283
      %289 = vmatprep.subr.mxu0 0.0
      %290 = vmatpush1.msra.mxu0 0.0
      %291 = vmatprep.subr.mxu0 0.0
      %292 = vmatpush1.msra.mxu0 0.0
      %293 = vmatprep.subr.mxu0 0.0
      %294 = vmatpush1.msra.mxu0 0.0
      %295 = vmatprep.subr.mxu0 0.0
      %296 = vmatpush1.msra.mxu0 0.0
      %297 = vmatprep.subr.mxu0 0.0
      %298 = vmatpush1.msra.mxu0 0.0
      %299 = vmatprep.subr.mxu0 0.0
      %300 = vmatpush1.msra.mxu0 0.0
      %301 = vmatprep.subr.mxu0 0.0
      %302 = vmatpush1.msra.mxu0 0.0
      %303 = vmatprep.subr.mxu0 0.0
      %304 = vmatpush1.msra.mxu0 0.0
      %305 = vmatprep.subr.mxu0 0.0
      %306 = vmatpush1.msra.mxu0 0.0
      %307 = vmatprep.subr.mxu0 0.0
      %308 = vmatpush1.msra.mxu0 0.0
      %309 = vmatprep.subr.mxu0 0.0
      %310 = vmatpush1.msra.mxu0 0.0
      %311 = vmatprep.subr.mxu0 0.0
      %312 = vmatpush1.msra.mxu0 0.0
      %313 = vmatprep.subr.mxu0 0.0
      %314 = vmatpush1.msra.mxu0 0.0
      %315 = vmatprep.subr.mxu0 0.0
      %316 = vmatpush1.msra.mxu0 0.0
      %317 = vmatprep.subr.mxu0 0.0
      %318 = vmatpush1.msra.mxu0 0.0
      %319 = vmatprep.subr.mxu0 0.0
      %320 = vmatpush1.msra.mxu0 0.0
      %321 = vmatprep.subr.mxu0 0.0
      %322 = vmatpush1.msra.mxu0 0.0
      %323 = vmatprep.subr.mxu0 0.0
      %324 = vmatpush1.msra.mxu0 0.0
      %325 = vmatprep.subr.mxu0 0.0
      %326 = vmatpush1.msra.mxu0 0.0
      %327 = vmatprep.subr.mxu0 0.0
      %328 = vmatpush1.msra.mxu0 0.0
      %329 = vmatprep.subr.mxu0 0.0
      %330 = vmatpush1.msra.mxu0 0.0
      %331 = vmatprep.subr.mxu0 0.0
      %332 = vmatpush1.msra.mxu0 0.0
      %333 = vmatprep.subr.mxu0 0.0
      %334 = vmatpush1.msra.mxu0 0.0
      %335 = vmatprep.subr.mxu0 0.0
      %336 = vmatpush1.msra.mxu0 0.0
      %337 = vmatprep.subr.mxu0 0.0
      %338 = vmatpush1.msra.mxu0 0.0
      %339 = vmatprep.subr.mxu0 0.0
      %340 = vmatpush1.msra.mxu0 0.0
      %341 = vmatprep.subr.mxu0 0.0
      %342 = vmatpush1.msra.mxu0 0.0
      %343 = vmatprep.subr.mxu0 0.0
      %344 = vmatpush1.msra.mxu0 0.0
      %345 = vmatprep.subr.mxu0 0.0
      %346 = vmatpush1.msra.mxu0 0.0
      %347 = vmatprep.subr.mxu0 0.0
      %348 = vmatpush1.msra.mxu0 0.0
      %349 = vmatprep.subr.mxu0 0.0
      %350 = vmatpush1.msra.mxu0 0.0
      %351 = vmatprep.mubr.f32.mxu0 0.0
      %352 = vmatmul.mubr.f32.gmra.mrb[0].mxu0 %v277
      %v353 = vpop.f32.mrb[0].mxu0
      %v354 = vadd.f32 %v266, %v353
      %v355 = vpop.f32.mrb[0].mxu0
      %v356 = vadd.f32 %v266, %v355
      %357 = vmatprep.mubr.f32.mxu0 0.0
      %358 = vmatmul.mubr.f32.gmra.mrb[0].mxu0 %v280
      %v359 = vpop.f32.mrb[0].mxu0
      %v360 = vadd.f32 %v271, %v359
      %v361 = vpop.f32.mrb[0].mxu0
      %v362 = vadd.f32 %v271, %v361
      %363 = vdwg.mxu0
      %v364 = vmax.f32 %v354, 0.0
      %v365 = vmax.f32 %v356, 0.0
      %v366 = vmax.f32 %v360, 0.0
      %v367 = vmax.f32 %v362, 0.0
      %v368 = vld [vmem:[#allocation2] sm:$0xff]
      %v369 = vld [vmem:[#allocation2 + $0x8] sm:$0xff]
      %v370 = vadd.f32 %v364, %v365
      %371 = vadd.xlane.f32.xlu0 %v370
      %v372 = vpop.xlane.xlu0 %371
      %v373 = vadd.f32 %v366, %v367
      %374 = vadd.xlane.f32.xlu0 %v373
      %v375 = vpop.xlane.xlu0 %374
      %v376 = vadd.f32 %v368, %v372
      %v377 = vadd.f32 %v369, %v375
      %vm378 = vcmask 7168
      %379 = vst.msk [vmem:[#allocation2] sm:$0xff] %vm378, %v376
      %380 = vst.msk [vmem:[#allocation2 + $0x8] sm:$0xff] %vm378, %v377
      // Predicated region
      $region45: #{tpu_custom_call.1} parent=39 // pred_check
        %p381 = pneg %p251
      $region46: #{tpu_custom_call.1} parent=39 // pred_check_branch
        %383 = sbr.rel (%p381) target = $region48
      $region47: #{tpu_custom_call.1} parent=39 // pred_region
        %v384 = vld [vmem:[%s3] sm:$0xff]
        %v385 = vld [vmem:[#allocation2] sm:$0xff]
        %v386 = vld [vmem:[#allocation2 + $0x8] sm:$0xff]
        %v387 = vld [vmem:[%s4] sm:$0xff]
        %vm388 = vcmask 130048
        %v390 = vsel %vm388, %v384, 0
        %392 = vmatprep.subr.mxu0 0.0
        %393 = vmatpush1.msra.mxu0 %v385
        %394 = vmatprep.subr.mxu0 0.0
        %395 = vmatpush1.msra.mxu0 %v386
        %396 = vmatprep.subr.mxu0 0.0
        %397 = vmatpush1.msra.mxu0 0.0
        %398 = vmatprep.subr.mxu0 0.0
        %399 = vmatpush1.msra.mxu0 0.0
        %400 = vmatprep.subr.mxu0 0.0
        %401 = vmatpush1.msra.mxu0 0.0
        %402 = vmatprep.subr.mxu0 0.0
        %403 = vmatpush1.msra.mxu0 0.0
        %404 = vmatprep.subr.mxu0 0.0
        %405 = vmatpush1.msra.mxu0 0.0
        %406 = vmatprep.subr.mxu0 0.0
        %407 = vmatpush1.msra.mxu0 0.0
        %408 = vmatprep.subr.mxu0 0.0
        %409 = vmatpush1.msra.mxu0 0.0
        %410 = vmatprep.subr.mxu0 0.0
        %411 = vmatpush1.msra.mxu0 0.0
        %412 = vmatprep.subr.mxu0 0.0
        %413 = vmatpush1.msra.mxu0 0.0
        %414 = vmatprep.subr.mxu0 0.0
        %415 = vmatpush1.msra.mxu0 0.0
        %416 = vmatprep.subr.mxu0 0.0
        %417 = vmatpush1.msra.mxu0 0.0
        %418 = vmatprep.subr.mxu0 0.0
        %419 = vmatpush1.msra.mxu0 0.0
        %420 = vmatprep.subr.mxu0 0.0
        %421 = vmatpush1.msra.mxu0 0.0
        %422 = vmatprep.subr.mxu0 0.0
        %423 = vmatpush1.msra.mxu0 0.0
        %424 = vmatprep.subr.mxu0 0.0
        %425 = vmatpush1.msra.mxu0 0.0
        %426 = vmatprep.subr.mxu0 0.0
        %427 = vmatpush1.msra.mxu0 0.0
        %428 = vmatprep.subr.mxu0 0.0
        %429 = vmatpush1.msra.mxu0 0.0
        %430 = vmatprep.subr.mxu0 0.0
        %431 = vmatpush1.msra.mxu0 0.0
        %432 = vmatprep.subr.mxu0 0.0
        %433 = vmatpush1.msra.mxu0 0.0
        %434 = vmatprep.subr.mxu0 0.0
        %435 = vmatpush1.msra.mxu0 0.0
        %436 = vmatprep.subr.mxu0 0.0
        %437 = vmatpush1.msra.mxu0 0.0
        %438 = vmatprep.subr.mxu0 0.0
        %439 = vmatpush1.msra.mxu0 0.0
        %440 = vmatprep.subr.mxu0 0.0
        %441 = vmatpush1.msra.mxu0 0.0
        %442 = vmatprep.subr.mxu0 0.0
        %443 = vmatpush1.msra.mxu0 0.0
        %444 = vmatprep.subr.mxu0 0.0
        %445 = vmatpush1.msra.mxu0 0.0
        %446 = vmatprep.subr.mxu0 0.0
        %447 = vmatpush1.msra.mxu0 0.0
        %448 = vmatprep.subr.mxu0 0.0
        %449 = vmatpush1.msra.mxu0 0.0
        %450 = vmatprep.subr.mxu0 0.0
        %451 = vmatpush1.msra.mxu0 0.0
        %452 = vmatprep.subr.mxu0 0.0
        %453 = vmatpush1.msra.mxu0 0.0
        %454 = vmatprep.subr.mxu0 0.0
        %455 = vmatpush1.msra.mxu0 0.0
        %456 = vmatprep.mubr.f32.mxu0 0.0
        %457 = vmatmul.mubr.f32.gmra.mrb[0].mxu0 %v390
        %v458 = vpop.f32.mrb[0].mxu0
        %v459 = vadd.f32 %v387, %v458
        %v460 = vpop.f32.mrb[0].mxu0
        %461 = vdwg.mxu0
        %462 = vst.msk [vmem:[%s250] sm:$0xff] %vm378, %v459
      $region48: #{tpu_custom_call.1} parent=39 // pred_fallthru
        _
      %p463 = scmp.lt.s32.totalorder %s20, 1
      %s464 = scalar_select %p463, %s20, 1
      %s465 = smul.addr %s464, 8
      %s466 = scalar_lea.vmem %s5, %s465
      // Predicated region
      $region49: #{tpu_custom_call.1} parent=39 // pred_check
        %p467 = pneg %p158
      $region50: #{tpu_custom_call.1} parent=39 // pred_check_branch
        %469 = sbr.rel (%p467) target = $region52
      $region51: #{tpu_custom_call.1} parent=39 // pred_region
        _
      $region52: #{tpu_custom_call.1} parent=39 // pred_fallthru
        _
    $region40: #{tpu_custom_call.1} parent=5 // pred_fallthru
      _
    %p470 = scmp.le.s32.totalorder 2, %s11
    // Predicated region
    $region53: #{tpu_custom_call.1} parent=5 // pred_check
      %p471 = pneg %p470
    $region54: #{tpu_custom_call.1} parent=5 // pred_check_branch
      %473 = sbr.rel (%p471) target = $region56
    $region55: #{tpu_custom_call.1} parent=5 // pred_region
      %s474 = ssub.s32 %s11, 2
      // Predicated region
      $region57: #{tpu_custom_call.1} parent=55 // pred_check
        %p475 = pneg %p164
      $region58: #{tpu_custom_call.1} parent=55 // pred_check_branch
        %477 = sbr.rel (%p475) target = $region60
      $region59: #{tpu_custom_call.1} parent=55 // pred_region
        %p478 = scmp.lt.s32.totalorder %s22, 1
        %s479 = scalar_select %p478, %s22, 1
        %s480 = smul.addr %s479, 8
        %s481 = scalar_lea.vmem %s5, %s480
      $region60: #{tpu_custom_call.1} parent=55 // pred_fallthru
        _
    $region56: #{tpu_custom_call.1} parent=5 // pred_fallthru
      _
  $region6: #{tpu_custom_call.1} parent=0 // loop_footer
    %s15 = sadd.s32 1, %s11
  $region7: #{tpu_custom_call.1} parent=0 // loop_footer_branch
    %10 = sbr.rel target = $region3
  $region8: #{tpu_custom_call.1} parent=0 // loop_exit
    _

</llo_original>
